<compile_context>
chip_gen: v6e
topology: v6e:2x2x1
jax: 0.10.0
libtpu: 0.0.40
codegen_flags: <defaults>
</compile_context>

<pallas_src>
import functools
import math

import jax
import jax.numpy as jnp
from jax.experimental import pallas as pl
from jax.experimental.pallas import tpu as pltpu


# ----------------------------------------------------------------------------
# Kernels
# ----------------------------------------------------------------------------
def _pe_add_kernel(x_ref, pe_ref, o_ref):
    # x_ref/o_ref: (ts, B, D) blocks; pe_ref: (ts, 1, D) block, broadcast over B
    # (sublane broadcast, free slot-filler on an HBM-bound kernel).
    o_ref[...] = (x_ref[...] + pe_ref[...]).astype(o_ref.dtype)


def _pe_add_dropout_kernel(seed_ref, x_ref, pe_ref, o_ref, *, threshold, inv_keep):
    y = x_ref[...] + pe_ref[...]                       # (ts, B, D)
    ts, B, D = y.shape

    # Counter-based PRNG: lowbias32-style hash of (global element index, seed).
    # Pure jnp integer ops -> lowers on TPU and in interpret mode; each grid
    # block / element gets an independent draw by construction.
    row = jax.lax.broadcasted_iota(jnp.int32, y.shape, 0) + pl.program_id(0) * ts
    col_b = jax.lax.broadcasted_iota(jnp.int32, y.shape, 1)
    col_d = jax.lax.broadcasted_iota(jnp.int32, y.shape, 2)
    idx = (row * B + col_b) * D + col_d

    h = idx.astype(jnp.uint32) * jnp.uint32(0x9E3779B9)
    h = h + seed_ref[0].astype(jnp.uint32) * jnp.uint32(0x85EBCA6B)
    h = h ^ (h >> jnp.uint32(16))
    h = h * jnp.uint32(0x7FEB352D)
    h = h ^ (h >> jnp.uint32(15))
    h = h * jnp.uint32(0x846CA68B)
    h = h ^ (h >> jnp.uint32(16))

    # Integer-threshold compare: P(keep) = 1 - p (to within 2^-32), no f32 math.
    keep = h >= jnp.uint32(threshold)
    o_ref[...] = jnp.where(keep, y * inv_keep, jnp.zeros_like(y)).astype(o_ref.dtype)


# ----------------------------------------------------------------------------
# Tiling helper
# ----------------------------------------------------------------------------
def _pick_tile_s(seq_len, row_bytes, target_bytes=2 * 1024 * 1024):
    """Rows per block: multiple of 8 (sublanes), ~target_bytes per x block,
    and at least 2 grid tiles whenever S allows (v7x two-TensorCore sharding).
    2 MiB keeps double-buffered x-in + out + pe well under every generation's
    scoped-VMEM default while sitting ~85% of the measured HBM roofline."""
    rows = max(8, (int(target_bytes) // max(int(row_bytes), 1) // 8) * 8)
    if seq_len >= 16:
        rows = min(rows, max(8, (seq_len // 2 // 8) * 8))
    return min(rows, seq_len)


# ----------------------------------------------------------------------------
# Module-equivalent wrapper
# ----------------------------------------------------------------------------
class PositionalEncoding:
    def __init__(self, d_model, dropout=0.1, max_len=5000):
        self.p = float(dropout)
        # Buffer `pe` built exactly as in the PyTorch __init__ (plain-JAX glue).
        position = jnp.arange(0, max_len, dtype=jnp.float32)[:, None]           # (L, 1)
        div_term = jnp.exp(
            jnp.arange(0, d_model, 2, dtype=jnp.float32)
            * (-math.log(10000.0) / d_model)
        )                                                                        # (D/2,)
        pe = jnp.zeros((max_len, d_model), dtype=jnp.float32)
        pe = pe.at[:, 0::2].set(jnp.sin(position * div_term))
        pe = pe.at[:, 1::2].set(jnp.cos(position * div_term))
        self.pe = pe[:, None, :]                                                 # (L, 1, D)
        self._pe_cache = {}                                                      # dtype -> cast pe

    def _pe_for(self, dtype):
        key = jnp.dtype(dtype).name
        if key not in self._pe_cache:
            self._pe_cache[key] = self.pe.astype(dtype)
        return self._pe_cache[key]

    def __call__(self, x, *, training=False, seed=0, tile_s=None):
        """x: (S, B, D).  training=True applies inverted dropout (own PRNG
        stream; not bit-identical to torch's dropout mask)."""
        S, B, D = x.shape
        itemsize = jnp.dtype(x.dtype).itemsize
        pe = self._pe_for(x.dtype)[:S]                       # (S, 1, D) -- tiny vs x

        if tile_s is None:
            ts = _pick_tile_s(S, B * D * itemsize)
        else:
            ts = min(int(tile_s), S)
            if ts < S:
                ts = max(8, (ts // 8) * 8)
        grid = (pl.cdiv(S, ts),)

        compiler_params = pltpu.CompilerParams(dimension_semantics=("parallel",))
        out_shape = jax.ShapeDtypeStruct((S, B, D), x.dtype)

        if not training or self.p == 0.0:
            x_spec = pl.BlockSpec((ts, B, D), lambda i: (i, 0, 0))
            pe_spec = pl.BlockSpec((ts, 1, D), lambda i: (i, 0, 0))
            cost = pl.CostEstimate(
                flops=S * B * D,
                transcendentals=0,
                bytes_accessed=(2 * S * B * D + S * D) * itemsize,
            )
            return pl.pallas_call(
                _pe_add_kernel,
                out_shape=out_shape,
                grid_spec=pltpu.PrefetchScalarGridSpec(
                    num_scalar_prefetch=0,
                    grid=grid,
                    in_specs=[x_spec, pe_spec],
                    out_specs=x_spec,
                ),
                compiler_params=compiler_params,
                cost_estimate=cost,
            )(x, pe)

        if self.p >= 1.0:
            # torch.nn.Dropout(p=1.0): everything dropped.
            return jnp.zeros_like(x)

        # Training path: inverted dropout via the in-kernel hash PRNG.
        threshold = min(int(round(self.p * 4294967296.0)), 4294967295)
        inv_keep = 1.0 / (1.0 - self.p)
        seed_arr = jnp.asarray([seed], dtype=jnp.int32)
        kernel = functools.partial(
            _pe_add_dropout_kernel, threshold=threshold, inv_keep=inv_keep
        )
        x_spec = pl.BlockSpec((ts, B, D), lambda i, seed_ref: (i, 0, 0))
        pe_spec = pl.BlockSpec((ts, 1, D), lambda i, seed_ref: (i, 0, 0))
        cost = pl.CostEstimate(
            flops=3 * S * B * D,
            transcendentals=0,
            bytes_accessed=(2 * S * B * D + S * D) * itemsize,
        )
        return pl.pallas_call(
            kernel,
            out_shape=out_shape,
            grid_spec=pltpu.PrefetchScalarGridSpec(
                num_scalar_prefetch=1,
                grid=grid,
                in_specs=[x_spec, pe_spec],
                out_specs=x_spec,
            ),
            compiler_params=compiler_params,
            cost_estimate=cost,
        )(seed_arr, x, pe)


# ----------------------------------------------------------------------------
# Main
# ----------------------------------------------------------------------------
if __name__ == "__main__":
    D = 32
    module = PositionalEncoding(d_model=D, dropout=0.1, max_len=64)

    # ---- eval-mode, single block --------------------------------------
    S, B = 8, 2
    x = jax.random.normal(jax.random.PRNGKey(0), (S, B, D), dtype=jnp.float32)
    out = jax.block_until_ready(module(x, training=False))
    ref = x + module.pe[:S]
    assert out.shape == (S, B, D)
    assert jnp.allclose(out, ref, atol=1e-6), "eval-mode mismatch vs reference"

    # ---- eval-mode, multi-block grid (exercises tiling over S) ---------
    S2 = 24
    x2 = jax.random.normal(jax.random.PRNGKey(1), (S2, B, D), dtype=jnp.float32)
    out2 = jax.block_until_ready(module(x2, training=False, tile_s=8))
    ref2 = x2 + module.pe[:S2]
    assert jnp.allclose(out2, ref2, atol=1e-6), "tiled eval-mode mismatch"

    # ---- training-mode dropout: each element is 0 or scaled (x+pe) -----
    out_t = jax.block_until_ready(module(x2, training=True, seed=123, tile_s=8))
    scaled = ref2 / (1.0 - module.p)
    ok = jnp.isclose(out_t, 0.0, atol=1e-6) | jnp.isclose(
        out_t, scaled, rtol=1e-5, atol=1e-6
    )
    assert out_t.shape == (S2, B, D)
    assert bool(jnp.all(ok)), "dropout output is not in {0, (x+pe)/(1-p)}"
    # Some elements (of those clearly nonzero) should be dropped, but far
    # fewer than half (p = 0.1).
    clear = jnp.abs(scaled) > 1e-3
    dropped_frac = jnp.sum((out_t == 0.0) & clear) / jnp.maximum(jnp.sum(clear), 1)
    assert 0.0 < float(dropped_frac) < 0.5, "dropout rate looks wrong"

    print("KERNEL_OK")
</pallas_src>

<mosaic_0001>
module attributes {stable_mosaic.version = 11 : i64} {
  func.func @_pe_add_kernel(%arg0: i32, %arg1: memref<8x2x32xf32, #tpu.memory_space<vmem>>, %arg2: memref<8x1x32xf32, #tpu.memory_space<vmem>>, %arg3: memref<8x2x32xf32, #tpu.memory_space<vmem>>) attributes {dimension_semantics = [#tpu.dimension_semantics<parallel>], iteration_bounds = array<i64: 1>, scalar_prefetch = 0 : i64, scratch_operands = 0 : i64, tpu.core_type = #tpu.core_type<tc>, window_params = [{transform_indices = @transform_0, window_bounds = array<i64: 8, 2, 32>}, {transform_indices = @transform_1, window_bounds = array<i64: 8, 1, 32>}, {transform_indices = @transform_2, window_bounds = array<i64: 8, 2, 32>}]} {
    %c0 = arith.constant 0 : index
    %c0_0 = arith.constant 0 : index
    %c0_1 = arith.constant 0 : index
    %0 = vector.load %arg1[%c0, %c0_0, %c0_1] : memref<8x2x32xf32, #tpu.memory_space<vmem>>, vector<8x2x32xf32>
    %c0_2 = arith.constant 0 : index
    %c0_3 = arith.constant 0 : index
    %c0_4 = arith.constant 0 : index
    %1 = vector.load %arg2[%c0_2, %c0_3, %c0_4] : memref<8x1x32xf32, #tpu.memory_space<vmem>>, vector<8x1x32xf32>
    %2 = vector.broadcast %1 : vector<8x1x32xf32> to vector<8x2x32xf32>
    %3 = arith.addf %0, %2 : vector<8x2x32xf32>
    %c0_5 = arith.constant 0 : index
    %c0_6 = arith.constant 0 : index
    %c0_7 = arith.constant 0 : index
    %4 = vector.load %arg3[%c0_5, %c0_6, %c0_7] : memref<8x2x32xf32, #tpu.memory_space<vmem>>, vector<8x2x32xf32>
    tpu.vector_store %arg3[%c0_5, %c0_6, %c0_7], %3 {strides = array<i32>} : memref<8x2x32xf32, #tpu.memory_space<vmem>>, vector<8x2x32xf32>,
    return
  }
  func.func @transform_0(%arg0: i32) -> (i32, i32, i32) {
    %c0_i32 = arith.constant 0 : i32
    %c0_i32_0 = arith.constant 0 : i32
    %c0_i32_1 = arith.constant 0 : i32
    return %arg0, %c0_i32, %c0_i32_0 : i32, i32, i32
  }
  func.func @transform_1(%arg0: i32) -> (i32, i32, i32) {
    %c0_i32 = arith.constant 0 : i32
    %c0_i32_0 = arith.constant 0 : i32
    %c0_i32_1 = arith.constant 0 : i32
    return %arg0, %c0_i32, %c0_i32_0 : i32, i32, i32
  }
  func.func @transform_2(%arg0: i32) -> (i32, i32, i32) {
    %c0_i32 = arith.constant 0 : i32
    %c0_i32_0 = arith.constant 0 : i32
    %c0_i32_1 = arith.constant 0 : i32
    return %arg0, %c0_i32, %c0_i32_0 : i32, i32, i32
  }
}

</mosaic_0001>

<llo_original>
// kernel: tpu_custom_call.1
$region0: #{tpu_custom_call.1}
  #allocation0 [shape = 'u32[]', space=smem, size = 0x4, offset = 0x4, fixed_abs, tag = 'smem constant byte address 0x4 - core index']
  #allocation1 [shape = 'u32[144,128]{1,0:T(1,128)}', space=vmem, size = 0x12000, scoped, tag = 'internal scratch']
  %s0 = inlined_call_operand.hbm [shape: f32[8,2,32], index: 0, kind: input, shape index: {}]
  %s1 = inlined_call_operand.hbm [shape: f32[8,1,32], index: 1, kind: input, shape index: {}]
  %s2 = inlined_call_operand.hbm [shape: f32[8,2,32], index: 2, kind: output, shape index: {}]
  %s3 = sld [smem:[#allocation0]]
  $region26: #{tpu_custom_call.1} parent=0
    _
  %s5 = ssub.s32 1, %s3
  %s6 = scalar_select 0, %s5, %s3
  $region1: #{tpu_custom_call.1} parent=0
    #allocation2 [shape = 'u8[8192]{0}', space=vmem, size = 0x2000, scoped, tag = 'input window, operand 0, single buffered']
    #allocation3 [shape = 's32[1]{0}', space=sflag, size = 0x4, scoped, tag = 'scoped memory for tpu_custom_call.1']
    #allocation4 [shape = 's32[1]{0}', space=sflag, size = 0x4, scoped, tag = 'scoped memory for tpu_custom_call.1']
    #allocation5 [shape = 'u8[4096]{0}', space=vmem, size = 0x1000, scoped, tag = 'input window, operand 1, single buffered']
    #allocation6 [shape = 's32[1]{0}', space=sflag, size = 0x4, scoped, tag = 'scoped memory for tpu_custom_call.1']
    #allocation7 [shape = 'u8[8192]{0}', space=vmem, size = 0x2000, scoped, tag = 'output window, operand 0, single buffered']
    %7 = vsyncpa [#allocation3], 0
    %8 = vsyncpa [#allocation6], 0
    %9 = vsyncpa [#allocation4], 0
    // Predicated region
    $region2: #{tpu_custom_call.1} parent=1 // pred_check
      _
    $region3: #{tpu_custom_call.1} parent=1 // pred_check_branch
      %11 = sbr.rel (0) target = $region5
    $region4: #{tpu_custom_call.1} parent=1 // pred_region
      %s13 = ssub.s32 256, 256
      %14 = vsyncadd [#allocation3], %s13
      %s15 = sshll.u32 [#allocation2], 4
      %s16 = int_to_ptr.vmem [resolvable:$true] %s15
      %21 = dma.hbm_to_vmem [thread:$0]  %s0, 256, %s16, [#allocation3], 32, 32, 2
    $region5: #{tpu_custom_call.1} parent=1 // pred_fallthru
      _
    // Predicated region
    $region6: #{tpu_custom_call.1} parent=1 // pred_check
      _
    $region7: #{tpu_custom_call.1} parent=1 // pred_check_branch
      %23 = sbr.rel (0) target = $region9
    $region8: #{tpu_custom_call.1} parent=1 // pred_region
      %s25 = ssub.s32 128, 128
      %26 = vsyncadd [#allocation6], %s25
      %s27 = sshll.u32 [#allocation5], 4
      %s28 = int_to_ptr.vmem [resolvable:$true] %s27
      %33 = dma.hbm_to_vmem [thread:$0]  %s1, 128, %s28, [#allocation6], 16, 16, 1
    $region9: #{tpu_custom_call.1} parent=1 // pred_fallthru
      _
    // Predicated region
    $region10: #{tpu_custom_call.1} parent=1 // pred_check
      _
    $region11: #{tpu_custom_call.1} parent=1 // pred_check_branch
      %35 = sbr.rel (0) target = $region13
    $region12: #{tpu_custom_call.1} parent=1 // pred_region
      %36 = dma.done [#allocation3], 256
    $region13: #{tpu_custom_call.1} parent=1 // pred_fallthru
      _
    // Predicated region
    $region14: #{tpu_custom_call.1} parent=1 // pred_check
      _
    $region15: #{tpu_custom_call.1} parent=1 // pred_check_branch
      %38 = sbr.rel (0) target = $region17
    $region16: #{tpu_custom_call.1} parent=1 // pred_region
      %39 = dma.done [#allocation6], 128
    $region17: #{tpu_custom_call.1} parent=1 // pred_fallthru
      _
    %v40 = vld [vmem:[#allocation2] sm:$0x3]
    %v41 = vld [vmem:[#allocation2 + $0x2] sm:$0x3]
    %v42 = vld [vmem:[#allocation2 + $0x4] sm:$0x3]
    %v43 = vld [vmem:[#allocation2 + $0x6] sm:$0x3]
    %v44 = vld [vmem:[#allocation2 + $0x8] sm:$0x3]
    %v45 = vld [vmem:[#allocation2 + $0xa] sm:$0x3]
    %v46 = vld [vmem:[#allocation2 + $0xc] sm:$0x3]
    %v47 = vld [vmem:[#allocation2 + $0xe] sm:$0x3]
    %v48 = vld [vmem:[#allocation5] sm:$0x1]
    %v49 = vld [vmem:[#allocation5 + $0x1] sm:$0x1]
    %v50 = vld [vmem:[#allocation5 + $0x2] sm:$0x1]
    %v51 = vld [vmem:[#allocation5 + $0x3] sm:$0x1]
    %v52 = vld [vmem:[#allocation5 + $0x4] sm:$0x1]
    %v53 = vld [vmem:[#allocation5 + $0x5] sm:$0x1]
    %v54 = vld [vmem:[#allocation5 + $0x6] sm:$0x1]
    %v55 = vld [vmem:[#allocation5 + $0x7] sm:$0x1]
    %v64 = vlaneseq
    %v65 = vshrl.u32 %v64, 7
    %v66 = vsub.s32 0, %v65
    %v67 = vrot.slane %v48, %v66
    %v68 = vlaneseq
    %v69 = vshrl.u32 %v68, 7
    %v70 = vsub.s32 0, %v69
    %v71 = vrot.slane %v49, %v70
    %v72 = vlaneseq
    %v73 = vshrl.u32 %v72, 7
    %v74 = vsub.s32 0, %v73
    %v75 = vrot.slane %v50, %v74
    %v76 = vlaneseq
    %v77 = vshrl.u32 %v76, 7
    %v78 = vsub.s32 0, %v77
    %v79 = vrot.slane %v51, %v78
    %v80 = vlaneseq
    %v81 = vshrl.u32 %v80, 7
    %v82 = vsub.s32 0, %v81
    %v83 = vrot.slane %v52, %v82
    %v84 = vlaneseq
    %v85 = vshrl.u32 %v84, 7
    %v86 = vsub.s32 0, %v85
    %v87 = vrot.slane %v53, %v86
    %v88 = vlaneseq
    %v89 = vshrl.u32 %v88, 7
    %v90 = vsub.s32 0, %v89
    %v91 = vrot.slane %v54, %v90
    %v92 = vlaneseq
    %v93 = vshrl.u32 %v92, 7
    %v94 = vsub.s32 0, %v93
    %v95 = vrot.slane %v55, %v94
    %v104 = vadd.f32 %v40, %v67
    %v105 = vadd.f32 %v41, %v71
    %v106 = vadd.f32 %v42, %v75
    %v107 = vadd.f32 %v43, %v79
    %v108 = vadd.f32 %v44, %v83
    %v109 = vadd.f32 %v45, %v87
    %v110 = vadd.f32 %v46, %v91
    %v111 = vadd.f32 %v47, %v95
    %vm112 = vcmask 254976
    %113 = vst.msk [vmem:[#allocation7] sm:$0x3] %vm112, %v104
    %114 = vst.msk [vmem:[#allocation7 + $0x2] sm:$0x3] %vm112, %v105
    %115 = vst.msk [vmem:[#allocation7 + $0x4] sm:$0x3] %vm112, %v106
    %116 = vst.msk [vmem:[#allocation7 + $0x6] sm:$0x3] %vm112, %v107
    %117 = vst.msk [vmem:[#allocation7 + $0x8] sm:$0x3] %vm112, %v108
    %118 = vst.msk [vmem:[#allocation7 + $0xa] sm:$0x3] %vm112, %v109
    %119 = vst.msk [vmem:[#allocation7 + $0xc] sm:$0x3] %vm112, %v110
    %120 = vst.msk [vmem:[#allocation7 + $0xe] sm:$0x3] %vm112, %v111
    // Predicated region
    $region18: #{tpu_custom_call.1} parent=1 // pred_check
      _
    $region19: #{tpu_custom_call.1} parent=1 // pred_check_branch
      %122 = sbr.rel (0) target = $region21
    $region20: #{tpu_custom_call.1} parent=1 // pred_region
      %s124 = ssub.s32 256, 256
      %125 = vsyncadd [#allocation4], %s124
      %s126 = sshll.u32 [#allocation7], 4
      %s127 = int_to_ptr.vmem [resolvable:$true] %s126
      %132 = dma.vmem_to_hbm [thread:$0]  %s127, 256, %s2, [#allocation4], 32, 32, 2
    $region21: #{tpu_custom_call.1} parent=1 // pred_fallthru
      _
    // Predicated region
    $region22: #{tpu_custom_call.1} parent=1 // pred_check
      _
    $region23: #{tpu_custom_call.1} parent=1 // pred_check_branch
      %134 = sbr.rel (0) target = $region25
    $region24: #{tpu_custom_call.1} parent=1 // pred_region
      %135 = dma.done [#allocation4], 256
    $region25: #{tpu_custom_call.1} parent=1 // pred_fallthru
      _
    %136 = vsyncpa [#allocation3], 1
    %137 = vsyncpa [#allocation6], 1
    %138 = vsyncpa [#allocation4], 1

</llo_original>
